<compile_context>
chip_gen: v7x
topology: tpu7x:2x2x1
jax: 0.10.0
libtpu: 0.0.40
codegen_flags: <defaults>
</compile_context>

<pallas_src>
import functools

import jax
import jax.numpy as jnp
from jax.experimental import pallas as pl
from jax.experimental.pallas import tpu as pltpu


def _round_up(a: int, b: int) -> int:
    return (a + b - 1) // b * b


def _default_num_chunks(batch: int) -> int:
    """One chunk per TensorCore: 2 on dual-TC v7x, 1 on single-TC v5e/v6e."""
    if batch < 2:
        return 1
    try:
        kind = jax.devices()[0].device_kind.lower()
    except Exception:
        kind = ""
    dual_tc = ("v7" in kind) or ("7x" in kind)
    return 2 if dual_tc else 1


def _double_conv_kernel(shifts, x_ref, mask_ref, w1_ref, b1_ref, w2_ref, b2_ref, o_ref):
    # x_ref:    (1, Cin_p,  L)      one chunk, channel-major, samples*spatial in lanes
    # mask_ref: (9, L)              precomputed per-tap validity masks (0/1)
    # w1_ref:   (Cmid_p, 9*Cin_p)   conv1 weights, columns = (tap, channel)
    # b1_ref:   (Cmid_p, 1)  f32
    # w2_ref:   (Cout_p, 9*Cmid_p)  conv2 weights
    # b2_ref:   (Cout_p, 1)  f32
    # o_ref:    (1, Cout_p, L)
    def im2col(act):
        # act: (C, L) -> (9*C, L). Tap t's rows are `act` shifted by that tap's
        # (dy, dx) offset; "same" zero padding comes from the precomputed mask.
        cols = []
        for t, shift in enumerate(shifts):
            if shift == 0:
                # center tap: no roll, mask is all-ones -> skip both.
                cols.append(act)
            else:
                rolled = pltpu.roll(act, shift, axis=1)
                cols.append(rolled * mask_ref[pl.ds(t, 1), :])
        return jnp.concatenate(cols, axis=0)

    x = x_ref[0]                                                     # (Cin_p, L)

    # ---- conv1 (single K = 9*Cin_p matmul) + bias + ReLU ----
    h1 = jnp.dot(w1_ref[...], im2col(x),
                 preferred_element_type=jnp.float32) + b1_ref[...]
    h1 = jnp.maximum(h1, 0.0).astype(x.dtype)                        # (Cmid_p, L)

    # ---- conv2 (single K = 9*Cmid_p matmul) + bias + ReLU ----
    out = jnp.dot(w2_ref[...], im2col(h1),
                  preferred_element_type=jnp.float32) + b2_ref[...]
    out = jnp.maximum(out, 0.0)                                      # (Cout_p, L)

    o_ref[0] = out.astype(o_ref.dtype)


@functools.partial(jax.jit, static_argnums=(5, 6))
def _double_conv_impl(x_nchw, w1, b1, w2, b2, num_chunks, compute_dtype):
    N, Cin, H, W = x_nchw.shape
    Cmid = w1.shape[0]
    Cout = w2.shape[0]
    HW = H * W
    S = N // num_chunks            # samples folded into the lane axis per chunk
    L = S * HW

    # Sublane tile for the MXU operand dtype (8 for f32, 16 for bf16) so all
    # in-kernel sublane concatenations stay tile-aligned.
    sub = 8 * (4 // jnp.dtype(compute_dtype).itemsize)
    Cin_p = _round_up(Cin, sub)
    Cmid_p = _round_up(Cmid, sub)
    Cout_p = _round_up(Cout, 8)    # output is stored in f32

    # Activations: NCHW -> (num_chunks, Cin_p, S*HW). For S == 1 this is a free
    # view; for the batch fold it is one tiny wrapper-side relayout.
    x = x_nchw.reshape(num_chunks, S, Cin, HW)
    x = jnp.transpose(x, (0, 2, 1, 3)).reshape(num_chunks, Cin, L)
    x = jnp.pad(x, ((0, 0), (0, Cin_p - Cin), (0, 0))).astype(compute_dtype)

    # Hoisted boundary masks + static roll shifts (tap order: oy-major, ox-minor,
    # matching the weight column order below).
    yy = jnp.arange(HW, dtype=jnp.int32) // W
    xx = jnp.arange(HW, dtype=jnp.int32) % W
    shifts = []
    mask_rows = []
    for oy in (-1, 0, 1):
        for ox in (-1, 0, 1):
            shifts.append((-(oy * W + ox)) % L)
            valid = ((yy + oy >= 0) & (yy + oy < H) &
                     (xx + ox >= 0) & (xx + ox < W))
            mask_rows.append(jnp.tile(valid, S))                     # (L,)
    masks = jnp.stack(mask_rows).astype(compute_dtype)               # (9, L)
    shifts = tuple(shifts)

    # Weights: (O, I, 3, 3) -> (O_p, 9*I_p) with column order (dy, dx, channel)
    # matching the im2col row order (tap-major, channel-minor).
    w1p = jnp.pad(w1, ((0, Cmid_p - Cmid), (0, Cin_p - Cin), (0, 0), (0, 0)))
    w1m = jnp.transpose(w1p, (0, 2, 3, 1)).reshape(Cmid_p, 9 * Cin_p).astype(compute_dtype)
    b1m = jnp.pad(b1, (0, Cmid_p - Cmid)).reshape(Cmid_p, 1).astype(jnp.float32)

    w2p = jnp.pad(w2, ((0, Cout_p - Cout), (0, Cmid_p - Cmid), (0, 0), (0, 0)))
    w2m = jnp.transpose(w2p, (0, 2, 3, 1)).reshape(Cout_p, 9 * Cmid_p).astype(compute_dtype)
    b2m = jnp.pad(b2, (0, Cout_p - Cout)).reshape(Cout_p, 1).astype(jnp.float32)

    kernel = functools.partial(_double_conv_kernel, shifts)
    out = pl.pallas_call(
        kernel,
        out_shape=jax.ShapeDtypeStruct((num_chunks, Cout_p, L), x_nchw.dtype),
        grid_spec=pltpu.PrefetchScalarGridSpec(
            num_scalar_prefetch=0,
            grid=(num_chunks,),
            in_specs=[
                pl.BlockSpec((1, Cin_p, L), lambda c: (c, 0, 0)),
                pl.BlockSpec((9, L), lambda c: (0, 0)),
                pl.BlockSpec((Cmid_p, 9 * Cin_p), lambda c: (0, 0)),
                pl.BlockSpec((Cmid_p, 1), lambda c: (0, 0)),
                pl.BlockSpec((Cout_p, 9 * Cmid_p), lambda c: (0, 0)),
                pl.BlockSpec((Cout_p, 1), lambda c: (0, 0)),
            ],
            out_specs=pl.BlockSpec((1, Cout_p, L), lambda c: (c, 0, 0)),
        ),
        compiler_params=pltpu.CompilerParams(
            dimension_semantics=("parallel",)),
    )(x, masks, w1m, b1m, w2m, b2m)

    # (num_chunks, Cout_p, S*HW) -> (N, Cout, H, W); free view when S == 1.
    out = out.reshape(num_chunks, Cout_p, S, HW)
    out = jnp.transpose(out, (0, 2, 1, 3)).reshape(N, Cout_p, H, W)
    return out[:, :Cout]


def double_convolution(x_nchw, w1, b1, w2, b2, *, num_chunks=None,
                       compute_dtype=jnp.float32):
    """Pallas implementation of DoubleConvolution.forward.

    x_nchw: (N, Cin, H, W) float32 (PyTorch layout)
    w1: (Cmid, Cin, 3, 3), b1: (Cmid,)   -- PyTorch Conv2d layout
    w2: (Cout, Cmid, 3, 3), b2: (Cout,)
    compute_dtype: MXU operand dtype (jnp.float32 for bit-close results,
                   jnp.bfloat16 recommended at real UNet channel counts).
    """
    N = x_nchw.shape[0]
    if num_chunks is None:
        num_chunks = _default_num_chunks(N)
    num_chunks = max(1, min(int(num_chunks), N))
    while N % num_chunks:
        num_chunks -= 1
    return _double_conv_impl(x_nchw, w1, b1, w2, b2, num_chunks,
                             jnp.dtype(compute_dtype))


def _reference(x, w1, b1, w2, b2):
    """Plain-JAX reference mirroring the PyTorch module (for verification)."""
    def conv(v, w, b):
        y = jax.lax.conv_general_dilated(
            v, w, window_strides=(1, 1), padding=((1, 1), (1, 1)),
            dimension_numbers=("NCHW", "OIHW", "NCHW"))
        return jax.nn.relu(y + b[None, :, None, None])
    return conv(conv(x, w1, b1), w2, b2)


if __name__ == "__main__":
    # DoubleConvolution(in_channels=4, out_channels=8), input (N=2, C=4, H=W=16)
    in_channels, out_channels = 4, 8
    N, H, W = 2, 16, 16

    key = jax.random.PRNGKey(0)
    kx, k1, k2, k3, k4 = jax.random.split(key, 5)

    x = jax.random.normal(kx, (N, in_channels, H, W), jnp.float32)

    # deterministic synthetic parameters (PyTorch Conv2d shapes), ~1/sqrt(fan_in) scale
    s1 = 1.0 / (in_channels * 9) ** 0.5
    s2 = 1.0 / (out_channels * 9) ** 0.5
    w1 = jax.random.uniform(k1, (out_channels, in_channels, 3, 3), jnp.float32, -s1, s1)
    b1 = jax.random.uniform(k2, (out_channels,), jnp.float32, -s1, s1)
    w2 = jax.random.uniform(k3, (out_channels, out_channels, 3, 3), jnp.float32, -s2, s2)
    b2 = jax.random.uniform(k4, (out_channels,), jnp.float32, -s2, s2)

    y_ref = _reference(x, w1, b1, w2, b2)

    # f32 MXU-operand path (bit-close to PyTorch semantics).
    y = double_convolution(x, w1, b1, w2, b2)
    jax.block_until_ready(y)
    assert y.shape == (N, out_channels, H, W)
    assert jnp.allclose(y, y_ref, atol=1e-4, rtol=1e-4), "Pallas f32 kernel mismatch vs reference"

    # Exercise both chunking strategies (batch fold for single-TC v5e/v6e,
    # 2-way parallel grid for dual-TC v7x) regardless of the detected chip.
    for nc in (1, 2):
        y_nc = double_convolution(x, w1, b1, w2, b2, num_chunks=nc)
        jax.block_until_ready(y_nc)
        assert jnp.allclose(y_nc, y_ref, atol=1e-4, rtol=1e-4), f"mismatch with num_chunks={nc}"

    # bf16 MXU-operand path (the recommended setting at real UNet sizes);
    # relaxed tolerance since operands are rounded to bf16 (f32 accumulation).
    y_bf16 = double_convolution(x, w1, b1, w2, b2, compute_dtype=jnp.bfloat16)
    jax.block_until_ready(y_bf16)
    assert jnp.allclose(y_bf16, y_ref, atol=5e-2, rtol=5e-2), "Pallas bf16 kernel mismatch vs reference"

    print("KERNEL_OK")
</pallas_src>

<mosaic_0001>
module attributes {stable_mosaic.version = 11 : i64} {
  func.func @_double_conv_kernel(%arg0: i32, %arg1: memref<1x8x512xf32, #tpu.memory_space<vmem>>, %arg2: memref<9x512xf32, #tpu.memory_space<vmem>>, %arg3: memref<8x72xf32, #tpu.memory_space<vmem>>, %arg4: memref<8x1xf32, #tpu.memory_space<vmem>>, %arg5: memref<8x72xf32, #tpu.memory_space<vmem>>, %arg6: memref<8x1xf32, #tpu.memory_space<vmem>>, %arg7: memref<1x8x512xf32, #tpu.memory_space<vmem>>) attributes {dimension_semantics = [#tpu.dimension_semantics<parallel>], iteration_bounds = array<i64: 1>, scalar_prefetch = 0 : i64, scratch_operands = 0 : i64, tpu.core_type = #tpu.core_type<tc>, window_params = [{transform_indices = @transform_0, window_bounds = array<i64: 1, 8, 512>}, {pipeline_mode = #tpu.pipeline_mode<synchronous>, transform_indices = @transform_1, window_bounds = array<i64: 9, 512>}, {pipeline_mode = #tpu.pipeline_mode<synchronous>, transform_indices = @transform_2, window_bounds = array<i64: 8, 72>}, {pipeline_mode = #tpu.pipeline_mode<synchronous>, transform_indices = @transform_3, window_bounds = array<i64: 8, 1>}, {pipeline_mode = #tpu.pipeline_mode<synchronous>, transform_indices = @transform_4, window_bounds = array<i64: 8, 72>}, {pipeline_mode = #tpu.pipeline_mode<synchronous>, transform_indices = @transform_5, window_bounds = array<i64: 8, 1>}, {transform_indices = @transform_6, window_bounds = array<i64: 1, 8, 512>}]} {
    %c0 = arith.constant 0 : index
    %c0_0 = arith.constant 0 : index
    %c0_1 = arith.constant 0 : index
    %0 = vector.load %arg1[%c0, %c0_0, %c0_1] : memref<1x8x512xf32, #tpu.memory_space<vmem>>, vector<1x8x512xf32>
    %1 = vector.shape_cast %0 : vector<1x8x512xf32> to vector<8x512xf32>
    %c0_2 = arith.constant 0 : index
    %c0_3 = arith.constant 0 : index
    %2 = vector.load %arg3[%c0_2, %c0_3] : memref<8x72xf32, #tpu.memory_space<vmem>>, vector<8x72xf32>
    %c17_i32 = arith.constant 17 : i32
    %3 = tpu.dynamic_rotate %1 by %c17_i32 dim 1 : vector<8x512xf32>, i32 -> vector<8x512xf32>
    %c0_4 = arith.constant 0 : index
    %c0_5 = arith.constant 0 : index
    %4 = vector.load %arg2[%c0_4, %c0_5] : memref<9x512xf32, #tpu.memory_space<vmem>>, vector<1x512xf32>
    %5 = vector.broadcast %4 : vector<1x512xf32> to vector<8x512xf32>
    %6 = arith.mulf %3, %5 : vector<8x512xf32>
    %c16_i32 = arith.constant 16 : i32
    %7 = tpu.dynamic_rotate %1 by %c16_i32 dim 1 : vector<8x512xf32>, i32 -> vector<8x512xf32>
    %c1 = arith.constant 1 : index
    %c0_6 = arith.constant 0 : index
    %8 = vector.load %arg2[%c1, %c0_6] : memref<9x512xf32, #tpu.memory_space<vmem>>, vector<1x512xf32>
    %9 = vector.broadcast %8 : vector<1x512xf32> to vector<8x512xf32>
    %10 = arith.mulf %7, %9 : vector<8x512xf32>
    %c15_i32 = arith.constant 15 : i32
    %11 = tpu.dynamic_rotate %1 by %c15_i32 dim 1 : vector<8x512xf32>, i32 -> vector<8x512xf32>
    %c2 = arith.constant 2 : index
    %c0_7 = arith.constant 0 : index
    %12 = vector.load %arg2[%c2, %c0_7] : memref<9x512xf32, #tpu.memory_space<vmem>>, vector<1x512xf32>
    %13 = vector.broadcast %12 : vector<1x512xf32> to vector<8x512xf32>
    %14 = arith.mulf %11, %13 : vector<8x512xf32>
    %c1_i32 = arith.constant 1 : i32
    %15 = tpu.dynamic_rotate %1 by %c1_i32 dim 1 : vector<8x512xf32>, i32 -> vector<8x512xf32>
    %c3 = arith.constant 3 : index
    %c0_8 = arith.constant 0 : index
    %16 = vector.load %arg2[%c3, %c0_8] : memref<9x512xf32, #tpu.memory_space<vmem>>, vector<1x512xf32>
    %17 = vector.broadcast %16 : vector<1x512xf32> to vector<8x512xf32>
    %18 = arith.mulf %15, %17 : vector<8x512xf32>
    %c511_i32 = arith.constant 511 : i32
    %19 = tpu.dynamic_rotate %1 by %c511_i32 dim 1 : vector<8x512xf32>, i32 -> vector<8x512xf32>
    %c5 = arith.constant 5 : index
    %c0_9 = arith.constant 0 : index
    %20 = vector.load %arg2[%c5, %c0_9] : memref<9x512xf32, #tpu.memory_space<vmem>>, vector<1x512xf32>
    %21 = vector.broadcast %20 : vector<1x512xf32> to vector<8x512xf32>
    %22 = arith.mulf %19, %21 : vector<8x512xf32>
    %c497_i32 = arith.constant 497 : i32
    %23 = tpu.dynamic_rotate %1 by %c497_i32 dim 1 : vector<8x512xf32>, i32 -> vector<8x512xf32>
    %c6 = arith.constant 6 : index
    %c0_10 = arith.constant 0 : index
    %24 = vector.load %arg2[%c6, %c0_10] : memref<9x512xf32, #tpu.memory_space<vmem>>, vector<1x512xf32>
    %25 = vector.broadcast %24 : vector<1x512xf32> to vector<8x512xf32>
    %26 = arith.mulf %23, %25 : vector<8x512xf32>
    %c496_i32 = arith.constant 496 : i32
    %27 = tpu.dynamic_rotate %1 by %c496_i32 dim 1 : vector<8x512xf32>, i32 -> vector<8x512xf32>
    %c7 = arith.constant 7 : index
    %c0_11 = arith.constant 0 : index
    %28 = vector.load %arg2[%c7, %c0_11] : memref<9x512xf32, #tpu.memory_space<vmem>>, vector<1x512xf32>
    %29 = vector.broadcast %28 : vector<1x512xf32> to vector<8x512xf32>
    %30 = arith.mulf %27, %29 : vector<8x512xf32>
    %c495_i32 = arith.constant 495 : i32
    %31 = tpu.dynamic_rotate %1 by %c495_i32 dim 1 : vector<8x512xf32>, i32 -> vector<8x512xf32>
    %c8 = arith.constant 8 : index
    %c0_12 = arith.constant 0 : index
    %32 = vector.load %arg2[%c8, %c0_12] : memref<9x512xf32, #tpu.memory_space<vmem>>, vector<1x512xf32>
    %33 = vector.broadcast %32 : vector<1x512xf32> to vector<8x512xf32>
    %34 = arith.mulf %31, %33 : vector<8x512xf32>
    %35 = tpu.concatenate %6, %10, %14, %18, %1, %22, %26, %30, %34 in 0 : vector<8x512xf32>, vector<8x512xf32>, vector<8x512xf32>, vector<8x512xf32>, vector<8x512xf32>, vector<8x512xf32>, vector<8x512xf32>, vector<8x512xf32>, vector<8x512xf32> -> vector<72x512xf32>
    %cst = arith.constant dense<0.000000e+00> : vector<8x512xf32>
    %36 = tpu.matmul %2, %35, %cst {dimension_numbers = #tpu.dot_dimension_numbers<[1], [0], [0], [1], [0, 0, 1, 1], [], []>} : vector<8x72xf32>, vector<72x512xf32>, vector<8x512xf32> -> vector<8x512xf32>
    %c0_13 = arith.constant 0 : index
    %c0_14 = arith.constant 0 : index
    %37 = vector.load %arg4[%c0_13, %c0_14] : memref<8x1xf32, #tpu.memory_space<vmem>>, vector<8x1xf32>
    %38 = vector.broadcast %37 : vector<8x1xf32> to vector<8x512xf32>
    %39 = arith.addf %36, %38 : vector<8x512xf32>
    %cst_15 = arith.constant 0.000000e+00 : f32
    %40 = vector.broadcast %cst_15 : f32 to vector<8x512xf32>
    %41 = arith.maximumf %39, %40 : vector<8x512xf32>
    %c0_16 = arith.constant 0 : index
    %c0_17 = arith.constant 0 : index
    %42 = vector.load %arg5[%c0_16, %c0_17] : memref<8x72xf32, #tpu.memory_space<vmem>>, vector<8x72xf32>
    %c17_i32_18 = arith.constant 17 : i32
    %43 = tpu.dynamic_rotate %41 by %c17_i32_18 dim 1 : vector<8x512xf32>, i32 -> vector<8x512xf32>
    %c0_19 = arith.constant 0 : index
    %c0_20 = arith.constant 0 : index
    %44 = vector.load %arg2[%c0_19, %c0_20] : memref<9x512xf32, #tpu.memory_space<vmem>>, vector<1x512xf32>
    %45 = vector.broadcast %44 : vector<1x512xf32> to vector<8x512xf32>
    %46 = arith.mulf %43, %45 : vector<8x512xf32>
    %c16_i32_21 = arith.constant 16 : i32
    %47 = tpu.dynamic_rotate %41 by %c16_i32_21 dim 1 : vector<8x512xf32>, i32 -> vector<8x512xf32>
    %c1_22 = arith.constant 1 : index
    %c0_23 = arith.constant 0 : index
    %48 = vector.load %arg2[%c1_22, %c0_23] : memref<9x512xf32, #tpu.memory_space<vmem>>, vector<1x512xf32>
    %49 = vector.broadcast %48 : vector<1x512xf32> to vector<8x512xf32>
    %50 = arith.mulf %47, %49 : vector<8x512xf32>
    %c15_i32_24 = arith.constant 15 : i32
    %51 = tpu.dynamic_rotate %41 by %c15_i32_24 dim 1 : vector<8x512xf32>, i32 -> vector<8x512xf32>
    %c2_25 = arith.constant 2 : index
    %c0_26 = arith.constant 0 : index
    %52 = vector.load %arg2[%c2_25, %c0_26] : memref<9x512xf32, #tpu.memory_space<vmem>>, vector<1x512xf32>
    %53 = vector.broadcast %52 : vector<1x512xf32> to vector<8x512xf32>
    %54 = arith.mulf %51, %53 : vector<8x512xf32>
    %c1_i32_27 = arith.constant 1 : i32
    %55 = tpu.dynamic_rotate %41 by %c1_i32_27 dim 1 : vector<8x512xf32>, i32 -> vector<8x512xf32>
    %c3_28 = arith.constant 3 : index
    %c0_29 = arith.constant 0 : index
    %56 = vector.load %arg2[%c3_28, %c0_29] : memref<9x512xf32, #tpu.memory_space<vmem>>, vector<1x512xf32>
    %57 = vector.broadcast %56 : vector<1x512xf32> to vector<8x512xf32>
    %58 = arith.mulf %55, %57 : vector<8x512xf32>
    %c511_i32_30 = arith.constant 511 : i32
    %59 = tpu.dynamic_rotate %41 by %c511_i32_30 dim 1 : vector<8x512xf32>, i32 -> vector<8x512xf32>
    %c5_31 = arith.constant 5 : index
    %c0_32 = arith.constant 0 : index
    %60 = vector.load %arg2[%c5_31, %c0_32] : memref<9x512xf32, #tpu.memory_space<vmem>>, vector<1x512xf32>
    %61 = vector.broadcast %60 : vector<1x512xf32> to vector<8x512xf32>
    %62 = arith.mulf %59, %61 : vector<8x512xf32>
    %c497_i32_33 = arith.constant 497 : i32
    %63 = tpu.dynamic_rotate %41 by %c497_i32_33 dim 1 : vector<8x512xf32>, i32 -> vector<8x512xf32>
    %c6_34 = arith.constant 6 : index
    %c0_35 = arith.constant 0 : index
    %64 = vector.load %arg2[%c6_34, %c0_35] : memref<9x512xf32, #tpu.memory_space<vmem>>, vector<1x512xf32>
    %65 = vector.broadcast %64 : vector<1x512xf32> to vector<8x512xf32>
    %66 = arith.mulf %63, %65 : vector<8x512xf32>
    %c496_i32_36 = arith.constant 496 : i32
    %67 = tpu.dynamic_rotate %41 by %c496_i32_36 dim 1 : vector<8x512xf32>, i32 -> vector<8x512xf32>
    %c7_37 = arith.constant 7 : index
    %c0_38 = arith.constant 0 : index
    %68 = vector.load %arg2[%c7_37, %c0_38] : memref<9x512xf32, #tpu.memory_space<vmem>>, vector<1x512xf32>
    %69 = vector.broadcast %68 : vector<1x512xf32> to vector<8x512xf32>
    %70 = arith.mulf %67, %69 : vector<8x512xf32>
    %c495_i32_39 = arith.constant 495 : i32
    %71 = tpu.dynamic_rotate %41 by %c495_i32_39 dim 1 : vector<8x512xf32>, i32 -> vector<8x512xf32>
    %c8_40 = arith.constant 8 : index
    %c0_41 = arith.constant 0 : index
    %72 = vector.load %arg2[%c8_40, %c0_41] : memref<9x512xf32, #tpu.memory_space<vmem>>, vector<1x512xf32>
    %73 = vector.broadcast %72 : vector<1x512xf32> to vector<8x512xf32>
    %74 = arith.mulf %71, %73 : vector<8x512xf32>
    %75 = tpu.concatenate %46, %50, %54, %58, %41, %62, %66, %70, %74 in 0 : vector<8x512xf32>, vector<8x512xf32>, vector<8x512xf32>, vector<8x512xf32>, vector<8x512xf32>, vector<8x512xf32>, vector<8x512xf32>, vector<8x512xf32>, vector<8x512xf32> -> vector<72x512xf32>
    %cst_42 = arith.constant dense<0.000000e+00> : vector<8x512xf32>
    %76 = tpu.matmul %42, %75, %cst_42 {dimension_numbers = #tpu.dot_dimension_numbers<[1], [0], [0], [1], [0, 0, 1, 1], [], []>} : vector<8x72xf32>, vector<72x512xf32>, vector<8x512xf32> -> vector<8x512xf32>
    %c0_43 = arith.constant 0 : index
    %c0_44 = arith.constant 0 : index
    %77 = vector.load %arg6[%c0_43, %c0_44] : memref<8x1xf32, #tpu.memory_space<vmem>>, vector<8x1xf32>
    %78 = vector.broadcast %77 : vector<8x1xf32> to vector<8x512xf32>
    %79 = arith.addf %76, %78 : vector<8x512xf32>
    %cst_45 = arith.constant 0.000000e+00 : f32
    %80 = vector.broadcast %cst_45 : f32 to vector<8x512xf32>
    %81 = arith.maximumf %79, %80 : vector<8x512xf32>
    %c0_46 = arith.constant 0 : index
    %c0_47 = arith.constant 0 : index
    %c0_48 = arith.constant 0 : index
    %82 = vector.load %arg7[%c0_46, %c0_47, %c0_48] : memref<1x8x512xf32, #tpu.memory_space<vmem>>, vector<1x8x512xf32>
    %83 = vector.shape_cast %82 : vector<1x8x512xf32> to vector<8x512xf32>
    %84 = vector.shape_cast %81 : vector<8x512xf32> to vector<1x8x512xf32>
    tpu.vector_store %arg7[%c0_46, %c0_47, %c0_48], %84 {strides = array<i32>} : memref<1x8x512xf32, #tpu.memory_space<vmem>>, vector<1x8x512xf32>,
    return
  }
  func.func @transform_0(%arg0: i32) -> (i32, i32, i32) {
    %c0_i32 = arith.constant 0 : i32
    %c0_i32_0 = arith.constant 0 : i32
    %c0_i32_1 = arith.constant 0 : i32
    return %arg0, %c0_i32, %c0_i32_0 : i32, i32, i32
  }
  func.func @transform_1(%arg0: i32) -> (i32, i32) {
    %c0_i32 = arith.constant 0 : i32
    %c0_i32_0 = arith.constant 0 : i32
    %c0_i32_1 = arith.constant 0 : i32
    return %c0_i32, %c0_i32_0 : i32, i32
  }
  func.func @transform_2(%arg0: i32) -> (i32, i32) {
    %c0_i32 = arith.constant 0 : i32
    %c0_i32_0 = arith.constant 0 : i32
    %c0_i32_1 = arith.constant 0 : i32
    return %c0_i32, %c0_i32_0 : i32, i32
  }
  func.func @transform_3(%arg0: i32) -> (i32, i32) {
    %c0_i32 = arith.constant 0 : i32
    %c0_i32_0 = arith.constant 0 : i32
    %c0_i32_1 = arith.constant 0 : i32
    return %c0_i32, %c0_i32_0 : i32, i32
  }
  func.func @transform_4(%arg0: i32) -> (i32, i32) {
    %c0_i32 = arith.constant 0 : i32
    %c0_i32_0 = arith.constant 0 : i32
    %c0_i32_1 = arith.constant 0 : i32
    return %c0_i32, %c0_i32_0 : i32, i32
  }
  func.func @transform_5(%arg0: i32) -> (i32, i32) {
    %c0_i32 = arith.constant 0 : i32
    %c0_i32_0 = arith.constant 0 : i32
    %c0_i32_1 = arith.constant 0 : i32
    return %c0_i32, %c0_i32_0 : i32, i32
  }
  func.func @transform_6(%arg0: i32) -> (i32, i32, i32) {
    %c0_i32 = arith.constant 0 : i32
    %c0_i32_0 = arith.constant 0 : i32
    %c0_i32_1 = arith.constant 0 : i32
    return %arg0, %c0_i32, %c0_i32_0 : i32, i32, i32
  }
}

</mosaic_0001>

<llo_original>
// kernel: _double_conv_impl.1
$region0: #{_double_conv_impl.1}
  #allocation0 [shape = 'u32[]', space=smem, size = 0x4, offset = 0x4, fixed_abs, tag = 'smem constant byte address 0x4 - core index']
  #allocation1 [shape = 'u32[144,128]{1,0:T(1,128)}', space=vmem, size = 0x12000, scoped, tag = 'internal scratch']
  %s0 = inlined_call_operand.vmem [shape: f32[1,8,512], index: 0, kind: input, shape index: {}]
  %s1 = inlined_call_operand.vmem [shape: f32[9,512], index: 1, kind: input, shape index: {}]
  %s2 = inlined_call_operand.vmem [shape: f32[8,72], index: 2, kind: input, shape index: {}]
  %s3 = inlined_call_operand.vmem [shape: f32[8,1], index: 3, kind: input, shape index: {}]
  %s4 = inlined_call_operand.vmem [shape: f32[8,72], index: 4, kind: input, shape index: {}]
  %s5 = inlined_call_operand.vmem [shape: f32[8,1], index: 5, kind: input, shape index: {}]
  %s6 = inlined_call_operand.vmem [shape: f32[1,8,512], index: 6, kind: output, shape index: {}]
  %s7 = sld [smem:[#allocation0]]
  $region34: #{_double_conv_impl.1} parent=0
    _
  %s9 = ssub.s32 1, %s7
  %s10 = scalar_select 0, %s9, %s7
  // Predicated region
  $region2: #{_double_conv_impl.1} parent=0 // pred_check
    _
  $region3: #{_double_conv_impl.1} parent=0 // pred_check_branch
    %12 = sbr.rel (0) target = $region5
  $region4: #{_double_conv_impl.1} parent=0 // pred_region
    _
  $region5: #{_double_conv_impl.1} parent=0 // pred_fallthru
    _
  // Predicated region
  $region6: #{_double_conv_impl.1} parent=0 // pred_check
    _
  $region7: #{_double_conv_impl.1} parent=0 // pred_check_branch
    %14 = sbr.rel (0) target = $region9
  $region8: #{_double_conv_impl.1} parent=0 // pred_region
    _
  $region9: #{_double_conv_impl.1} parent=0 // pred_fallthru
    _
  // Predicated region
  $region10: #{_double_conv_impl.1} parent=0 // pred_check
    _
  $region11: #{_double_conv_impl.1} parent=0 // pred_check_branch
    %16 = sbr.rel (0) target = $region13
  $region12: #{_double_conv_impl.1} parent=0 // pred_region
    _
  $region13: #{_double_conv_impl.1} parent=0 // pred_fallthru
    _
  // Predicated region
  $region14: #{_double_conv_impl.1} parent=0 // pred_check
    _
  $region15: #{_double_conv_impl.1} parent=0 // pred_check_branch
    %18 = sbr.rel (0) target = $region17
  $region16: #{_double_conv_impl.1} parent=0 // pred_region
    _
  $region17: #{_double_conv_impl.1} parent=0 // pred_fallthru
    _
  // Predicated region
  $region18: #{_double_conv_impl.1} parent=0 // pred_check
    _
  $region19: #{_double_conv_impl.1} parent=0 // pred_check_branch
    %20 = sbr.rel (0) target = $region21
  $region20: #{_double_conv_impl.1} parent=0 // pred_region
    _
  $region21: #{_double_conv_impl.1} parent=0 // pred_fallthru
    _
  // Predicated region
  $region22: #{_double_conv_impl.1} parent=0 // pred_check
    _
  $region23: #{_double_conv_impl.1} parent=0 // pred_check_branch
    %22 = sbr.rel (0) target = $region25
  $region24: #{_double_conv_impl.1} parent=0 // pred_region
    _
  $region25: #{_double_conv_impl.1} parent=0 // pred_fallthru
    _
  %v23 = vld [vmem:[%s0] sm:$0xff]
  %v24 = vld [vmem:[%s0 + $0x8] sm:$0xff]
  %v25 = vld [vmem:[%s0 + $0x10] sm:$0xff]
  %v26 = vld [vmem:[%s0 + $0x18] sm:$0xff]
  %v27 = vld [vmem:[%s2] sm:$0xff]
  %28 = vrot.lane.b32.xlu0 %v23, 17
  %v29 = vpop.permute.xlu0 %28
  %30 = vrot.lane.b32.xlu0 %v24, 17
  %v31 = vpop.permute.xlu0 %30
  %32 = vrot.lane.b32.xlu0 %v25, 17
  %v33 = vpop.permute.xlu0 %32
  %34 = vrot.lane.b32.xlu0 %v26, 17
  %v35 = vpop.permute.xlu0 %34
  %v36 = vlaneseq
  %v37 = vand.u32 %v36, 127
  %vm38 = vcmp.lt.s32.totalorder %v37, 17
  %v39 = vsel %vm38, %v33, %v35
  %v40 = vsel %vm38, %v31, %v33
  %v41 = vsel %vm38, %v29, %v31
  %v42 = vsel %vm38, %v35, %v29
  %v43 = vld [vmem:[%s1] ss:$8 sm:$0xf]
  %v45 = vlaneseq
  %v46 = vshrl.u32 %v45, 7
  %v47 = vsub.s32 0, %v46
  %v48 = vrot.slane %v43, %v47
  %v49 = vlaneseq
  %v50 = vshrl.u32 %v49, 7
  %v51 = vsub.s32 1, %v50
  %v52 = vrot.slane %v43, %v51
  %v53 = vlaneseq
  %v54 = vshrl.u32 %v53, 7
  %v55 = vsub.s32 2, %v54
  %v56 = vrot.slane %v43, %v55
  %v57 = vlaneseq
  %v58 = vshrl.u32 %v57, 7
  %v59 = vsub.s32 3, %v58
  %v60 = vrot.slane %v43, %v59
  %v65 = vmul.f32 %v42, %v48
  %v66 = vmul.f32 %v41, %v52
  %v67 = vmul.f32 %v40, %v56
  %v68 = vmul.f32 %v39, %v60
  %69 = vrot.lane.b32.xlu0 %v23, 16
  %v70 = vpop.permute.xlu0 %69
  %71 = vrot.lane.b32.xlu0 %v24, 16
  %v72 = vpop.permute.xlu0 %71
  %73 = vrot.lane.b32.xlu0 %v25, 16
  %v74 = vpop.permute.xlu0 %73
  %75 = vrot.lane.b32.xlu0 %v26, 16
  %v76 = vpop.permute.xlu0 %75
  %vm77 = vcmp.lt.s32.totalorder %v37, 16
  %v78 = vsel %vm77, %v74, %v76
  %v79 = vsel %vm77, %v72, %v74
  %v80 = vsel %vm77, %v70, %v72
  %v81 = vsel %vm77, %v76, %v70
  %s82 = scalar_lea.vmem %s1, 1
  %v83 = vld [vmem:[%s82] ss:$8 sm:$0xf]
  %v85 = vlaneseq
  %v86 = vshrl.u32 %v85, 7
  %v87 = vsub.s32 0, %v86
  %v88 = vrot.slane %v83, %v87
  %v89 = vlaneseq
  %v90 = vshrl.u32 %v89, 7
  %v91 = vsub.s32 1, %v90
  %v92 = vrot.slane %v83, %v91
  %v93 = vlaneseq
  %v94 = vshrl.u32 %v93, 7
  %v95 = vsub.s32 2, %v94
  %v96 = vrot.slane %v83, %v95
  %v97 = vlaneseq
  %v98 = vshrl.u32 %v97, 7
  %v99 = vsub.s32 3, %v98
  %v100 = vrot.slane %v83, %v99
  %v105 = vmul.f32 %v81, %v88
  %v106 = vmul.f32 %v80, %v92
  %v107 = vmul.f32 %v79, %v96
  %v108 = vmul.f32 %v78, %v100
  %109 = vrot.lane.b32.xlu0 %v23, 15
  %v110 = vpop.permute.xlu0 %109
  %111 = vrot.lane.b32.xlu0 %v24, 15
  %v112 = vpop.permute.xlu0 %111
  %113 = vrot.lane.b32.xlu0 %v25, 15
  %v114 = vpop.permute.xlu0 %113
  %115 = vrot.lane.b32.xlu0 %v26, 15
  %v116 = vpop.permute.xlu0 %115
  %vm117 = vcmp.lt.s32.totalorder %v37, 15
  %v118 = vsel %vm117, %v114, %v116
  %v119 = vsel %vm117, %v112, %v114
  %v120 = vsel %vm117, %v110, %v112
  %v121 = vsel %vm117, %v116, %v110
  %s122 = scalar_lea.vmem %s1, 2
  %v123 = vld [vmem:[%s122] ss:$8 sm:$0xf]
  %v125 = vlaneseq
  %v126 = vshrl.u32 %v125, 7
  %v127 = vsub.s32 0, %v126
  %v128 = vrot.slane %v123, %v127
  %v129 = vlaneseq
  %v130 = vshrl.u32 %v129, 7
  %v131 = vsub.s32 1, %v130
  %v132 = vrot.slane %v123, %v131
  %v133 = vlaneseq
  %v134 = vshrl.u32 %v133, 7
  %v135 = vsub.s32 2, %v134
  %v136 = vrot.slane %v123, %v135
  %v137 = vlaneseq
  %v138 = vshrl.u32 %v137, 7
  %v139 = vsub.s32 3, %v138
  %v140 = vrot.slane %v123, %v139
  %v145 = vmul.f32 %v121, %v128
  %v146 = vmul.f32 %v120, %v132
  %v147 = vmul.f32 %v119, %v136
  %v148 = vmul.f32 %v118, %v140
  %149 = vrot.lane.b32.xlu0 %v23, 1
  %v150 = vpop.permute.xlu0 %149
  %151 = vrot.lane.b32.xlu0 %v24, 1
  %v152 = vpop.permute.xlu0 %151
  %153 = vrot.lane.b32.xlu0 %v25, 1
  %v154 = vpop.permute.xlu0 %153
  %155 = vrot.lane.b32.xlu0 %v26, 1
  %v156 = vpop.permute.xlu0 %155
  %vm157 = vcmp.lt.s32.totalorder %v37, 1
  %v158 = vsel %vm157, %v154, %v156
  %v159 = vsel %vm157, %v152, %v154
  %v160 = vsel %vm157, %v150, %v152
  %v161 = vsel %vm157, %v156, %v150
  %s162 = scalar_lea.vmem %s1, 3
  %v163 = vld [vmem:[%s162] ss:$8 sm:$0xf]
  %v165 = vlaneseq
  %v166 = vshrl.u32 %v165, 7
  %v167 = vsub.s32 0, %v166
  %v168 = vrot.slane %v163, %v167
  %v169 = vlaneseq
  %v170 = vshrl.u32 %v169, 7
  %v171 = vsub.s32 1, %v170
  %v172 = vrot.slane %v163, %v171
  %v173 = vlaneseq
  %v174 = vshrl.u32 %v173, 7
  %v175 = vsub.s32 2, %v174
  %v176 = vrot.slane %v163, %v175
  %v177 = vlaneseq
  %v178 = vshrl.u32 %v177, 7
  %v179 = vsub.s32 3, %v178
  %v180 = vrot.slane %v163, %v179
  %v185 = vmul.f32 %v161, %v168
  %v186 = vmul.f32 %v160, %v172
  %v187 = vmul.f32 %v159, %v176
  %v188 = vmul.f32 %v158, %v180
  %189 = vrot.lane.b32.xlu0 %v23, 127
  %v190 = vpop.permute.xlu0 %189
  %191 = vrot.lane.b32.xlu0 %v24, 127
  %v192 = vpop.permute.xlu0 %191
  %193 = vrot.lane.b32.xlu0 %v25, 127
  %v194 = vpop.permute.xlu0 %193
  %195 = vrot.lane.b32.xlu0 %v26, 127
  %v196 = vpop.permute.xlu0 %195
  %vm197 = vcmp.lt.s32.totalorder %v37, 127
  %v198 = vsel %vm197, %v194, %v196
  %v199 = vsel %vm197, %v192, %v194
  %v200 = vsel %vm197, %v190, %v192
  %v201 = vsel %vm197, %v196, %v190
  %s202 = scalar_lea.vmem %s1, 5
  %v203 = vld [vmem:[%s202] ss:$8 sm:$0xf]
  %v205 = vlaneseq
  %v206 = vshrl.u32 %v205, 7
  %v207 = vsub.s32 0, %v206
  %v208 = vrot.slane %v203, %v207
  %v209 = vlaneseq
  %v210 = vshrl.u32 %v209, 7
  %v211 = vsub.s32 1, %v210
  %v212 = vrot.slane %v203, %v211
  %v213 = vlaneseq
  %v214 = vshrl.u32 %v213, 7
  %v215 = vsub.s32 2, %v214
  %v216 = vrot.slane %v203, %v215
  %v217 = vlaneseq
  %v218 = vshrl.u32 %v217, 7
  %v219 = vsub.s32 3, %v218
  %v220 = vrot.slane %v203, %v219
  %v225 = vmul.f32 %v200, %v208
  %v226 = vmul.f32 %v199, %v212
  %v227 = vmul.f32 %v198, %v216
  %v228 = vmul.f32 %v201, %v220
  %229 = vrot.lane.b32.xlu0 %v23, 113
  %v230 = vpop.permute.xlu0 %229
  %231 = vrot.lane.b32.xlu0 %v24, 113
  %v232 = vpop.permute.xlu0 %231
  %233 = vrot.lane.b32.xlu0 %v25, 113
  %v234 = vpop.permute.xlu0 %233
  %235 = vrot.lane.b32.xlu0 %v26, 113
  %v236 = vpop.permute.xlu0 %235
  %vm237 = vcmp.lt.s32.totalorder %v37, 113
  %v238 = vsel %vm237, %v234, %v236
  %v239 = vsel %vm237, %v232, %v234
  %v240 = vsel %vm237, %v230, %v232
  %v241 = vsel %vm237, %v236, %v230
  %s242 = scalar_lea.vmem %s1, 6
  %v243 = vld [vmem:[%s242] ss:$8 sm:$0xf]
  %v245 = vlaneseq
  %v246 = vshrl.u32 %v245, 7
  %v247 = vsub.s32 0, %v246
  %v248 = vrot.slane %v243, %v247
  %v249 = vlaneseq
  %v250 = vshrl.u32 %v249, 7
  %v251 = vsub.s32 1, %v250
  %v252 = vrot.slane %v243, %v251
  %v253 = vlaneseq
  %v254 = vshrl.u32 %v253, 7
  %v255 = vsub.s32 2, %v254
  %v256 = vrot.slane %v243, %v255
  %v257 = vlaneseq
  %v258 = vshrl.u32 %v257, 7
  %v259 = vsub.s32 3, %v258
  %v260 = vrot.slane %v243, %v259
  %v265 = vmul.f32 %v240, %v248
  %v266 = vmul.f32 %v239, %v252
  %v267 = vmul.f32 %v238, %v256
  %v268 = vmul.f32 %v241, %v260
  %269 = vrot.lane.b32.xlu0 %v23, 112
  %v270 = vpop.permute.xlu0 %269
  %271 = vrot.lane.b32.xlu0 %v24, 112
  %v272 = vpop.permute.xlu0 %271
  %273 = vrot.lane.b32.xlu0 %v25, 112
  %v274 = vpop.permute.xlu0 %273
  %275 = vrot.lane.b32.xlu0 %v26, 112
  %v276 = vpop.permute.xlu0 %275
  %vm277 = vcmp.lt.s32.totalorder %v37, 112
  %v278 = vsel %vm277, %v274, %v276
  %v279 = vsel %vm277, %v272, %v274
  %v280 = vsel %vm277, %v270, %v272
  %v281 = vsel %vm277, %v276, %v270
  %s282 = scalar_lea.vmem %s1, 7
  %v283 = vld [vmem:[%s282] ss:$8 sm:$0xf]
  %v285 = vlaneseq
  %v286 = vshrl.u32 %v285, 7
  %v287 = vsub.s32 0, %v286
  %v288 = vrot.slane %v283, %v287
  %v289 = vlaneseq
  %v290 = vshrl.u32 %v289, 7
  %v291 = vsub.s32 1, %v290
  %v292 = vrot.slane %v283, %v291
  %v293 = vlaneseq
  %v294 = vshrl.u32 %v293, 7
  %v295 = vsub.s32 2, %v294
  %v296 = vrot.slane %v283, %v295
  %v297 = vlaneseq
  %v298 = vshrl.u32 %v297, 7
  %v299 = vsub.s32 3, %v298
  %v300 = vrot.slane %v283, %v299
  %v305 = vmul.f32 %v280, %v288
  %v306 = vmul.f32 %v279, %v292
  %v307 = vmul.f32 %v278, %v296
  %v308 = vmul.f32 %v281, %v300
  %309 = vrot.lane.b32.xlu0 %v23, 111
  %v310 = vpop.permute.xlu0 %309
  %311 = vrot.lane.b32.xlu0 %v24, 111
  %v312 = vpop.permute.xlu0 %311
  %313 = vrot.lane.b32.xlu0 %v25, 111
  %v314 = vpop.permute.xlu0 %313
  %315 = vrot.lane.b32.xlu0 %v26, 111
  %v316 = vpop.permute.xlu0 %315
  %vm317 = vcmp.lt.s32.totalorder %v37, 111
  %v318 = vsel %vm317, %v314, %v316
  %v319 = vsel %vm317, %v312, %v314
  %v320 = vsel %vm317, %v310, %v312
  %v321 = vsel %vm317, %v316, %v310
  %s322 = scalar_lea.vmem %s1, 32
  %v323 = vld [vmem:[%s322] ss:$8 sm:$0xf]
  %v325 = vlaneseq
  %v326 = vshrl.u32 %v325, 7
  %v327 = vsub.s32 0, %v326
  %v328 = vrot.slane %v323, %v327
  %v329 = vlaneseq
  %v330 = vshrl.u32 %v329, 7
  %v331 = vsub.s32 1, %v330
  %v332 = vrot.slane %v323, %v331
  %v333 = vlaneseq
  %v334 = vshrl.u32 %v333, 7
  %v335 = vsub.s32 2, %v334
  %v336 = vrot.slane %v323, %v335
  %v337 = vlaneseq
  %v338 = vshrl.u32 %v337, 7
  %v339 = vsub.s32 3, %v338
  %v340 = vrot.slane %v323, %v339
  %v345 = vmul.f32 %v320, %v328
  %v346 = vmul.f32 %v319, %v332
  %v347 = vmul.f32 %v318, %v336
  %v348 = vmul.f32 %v321, %v340
  %v349 = vld [vmem:[%s3] sm:$0xff]
  %351 = vset.pattern.permute.xlu0 0
  %352 = vperm.xlu0 %351, %v349
  %v353 = vpop.permute.xlu0 %352
  %vm355 = vcmask 588800
  %v357 = vsel %vm355, %v27, 0
  %359 = vmatprep.subr.mxu0 %v66
  %360 = vmatpush1.msra.mxu0 %v65
  %361 = vmatprep.subr.mxu0 %v106
  %362 = vmatpush1.msra.mxu0 %v105
  %363 = vmatprep.subr.mxu0 %v146
  %364 = vmatpush1.msra.mxu0 %v145
  %365 = vmatprep.subr.mxu0 %v186
  %366 = vmatpush1.msra.mxu0 %v185
  %367 = vmatprep.subr.mxu0 %v24
  %368 = vmatpush1.msra.mxu0 %v23
  %369 = vmatprep.subr.mxu0 %v226
  %370 = vmatpush1.msra.mxu0 %v225
  %371 = vmatprep.subr.mxu0 %v266
  %372 = vmatpush1.msra.mxu0 %v265
  %373 = vmatprep.subr.mxu0 %v306
  %374 = vmatpush1.msra.mxu0 %v305
  %375 = vmatprep.subr.mxu0 %v346
  %376 = vmatpush1.msra.mxu0 %v345
  %377 = vmatprep.subr.mxu0 0.0
  %378 = vmatpush1.msra.mxu0 0.0
  %379 = vmatprep.subr.mxu0 0.0
  %380 = vmatpush1.msra.mxu0 0.0
  %381 = vmatprep.subr.mxu0 0.0
  %382 = vmatpush1.msra.mxu0 0.0
  %383 = vmatprep.subr.mxu0 0.0
  %384 = vmatpush1.msra.mxu0 0.0
  %385 = vmatprep.subr.mxu0 0.0
  %386 = vmatpush1.msra.mxu0 0.0
  %387 = vmatprep.subr.mxu0 0.0
  %388 = vmatpush1.msra.mxu0 0.0
  %389 = vmatprep.subr.mxu0 0.0
  %390 = vmatpush1.msra.mxu0 0.0
  %391 = vmatprep.subr.mxu0 0.0
  %392 = vmatpush1.msra.mxu0 0.0
  %393 = vmatprep.subr.mxu0 0.0
  %394 = vmatpush1.msra.mxu0 0.0
  %395 = vmatprep.subr.mxu0 0.0
  %396 = vmatpush1.msra.mxu0 0.0
  %397 = vmatprep.subr.mxu0 0.0
  %398 = vmatpush1.msra.mxu0 0.0
  %399 = vmatprep.subr.mxu0 0.0
  %400 = vmatpush1.msra.mxu0 0.0
  %401 = vmatprep.subr.mxu0 0.0
  %402 = vmatpush1.msra.mxu0 0.0
  %403 = vmatprep.subr.mxu0 0.0
  %404 = vmatpush1.msra.mxu0 0.0
  %405 = vmatprep.subr.mxu0 0.0
  %406 = vmatpush1.msra.mxu0 0.0
  %407 = vmatprep.subr.mxu0 0.0
  %408 = vmatpush1.msra.mxu0 0.0
  %409 = vmatprep.subr.mxu0 0.0
  %410 = vmatpush1.msra.mxu0 0.0
  %411 = vmatprep.subr.mxu0 0.0
  %412 = vmatpush1.msra.mxu0 0.0
  %413 = vmatprep.subr.mxu0 0.0
  %414 = vmatpush1.msra.mxu0 0.0
  %415 = vmatprep.subr.mxu0 0.0
  %416 = vmatpush1.msra.mxu0 0.0
  %417 = vmatprep.subr.mxu0 0.0
  %418 = vmatpush1.msra.mxu0 0.0
  %419 = vmatprep.subr.mxu0 0.0
  %420 = vmatpush1.msra.mxu0 0.0
  %421 = vmatprep.subr.mxu0 0.0
  %422 = vmatpush1.msra.mxu0 0.0
  %423 = vmatprep.mubr.f32.mxu0 0.0
  %424 = vmatmul.mubr.f32.gmra.mrb[0].mxu0 %v357
  %v425 = vpop.f32.mrb[0].mxu0
  %v426 = vadd.f32 %v353, %v425
  %v427 = vpop.f32.mrb[0].mxu0
  %v428 = vadd.f32 %v353, %v427
  %429 = vdwg.mxu0
  %430 = vmatprep.subr.mxu0 %v68
  %431 = vmatpush1.msra.mxu0 %v67
  %432 = vmatprep.subr.mxu0 %v108
  %433 = vmatpush1.msra.mxu0 %v107
  %434 = vmatprep.subr.mxu0 %v148
  %435 = vmatpush1.msra.mxu0 %v147
  %436 = vmatprep.subr.mxu0 %v188
  %437 = vmatpush1.msra.mxu0 %v187
  %438 = vmatprep.subr.mxu0 %v26
  %439 = vmatpush1.msra.mxu0 %v25
  %440 = vmatprep.subr.mxu0 %v228
  %441 = vmatpush1.msra.mxu0 %v227
  %442 = vmatprep.subr.mxu0 %v268
  %443 = vmatpush1.msra.mxu0 %v267
  %444 = vmatprep.subr.mxu0 %v308
  %445 = vmatpush1.msra.mxu0 %v307
  %446 = vmatprep.subr.mxu0 %v348
  %447 = vmatpush1.msra.mxu0 %v347
  %448 = vmatprep.subr.mxu0 0.0
  %449 = vmatpush1.msra.mxu0 0.0
  %450 = vmatprep.subr.mxu0 0.0
  %451 = vmatpush1.msra.mxu0 0.0
  %452 = vmatprep.subr.mxu0 0.0
  %453 = vmatpush1.msra.mxu0 0.0
  %454 = vmatprep.subr.mxu0 0.0
  %455 = vmatpush1.msra.mxu0 0.0
  %456 = vmatprep.subr.mxu0 0.0
  %457 = vmatpush1.msra.mxu0 0.0
  %458 = vmatprep.subr.mxu0 0.0
  %459 = vmatpush1.msra.mxu0 0.0
  %460 = vmatprep.subr.mxu0 0.0
  %461 = vmatpush1.msra.mxu0 0.0
  %462 = vmatprep.subr.mxu0 0.0
  %463 = vmatpush1.msra.mxu0 0.0
  %464 = vmatprep.subr.mxu0 0.0
  %465 = vmatpush1.msra.mxu0 0.0
  %466 = vmatprep.subr.mxu0 0.0
  %467 = vmatpush1.msra.mxu0 0.0
  %468 = vmatprep.subr.mxu0 0.0
  %469 = vmatpush1.msra.mxu0 0.0
  %470 = vmatprep.subr.mxu0 0.0
  %471 = vmatpush1.msra.mxu0 0.0
  %472 = vmatprep.subr.mxu0 0.0
  %473 = vmatpush1.msra.mxu0 0.0
  %474 = vmatprep.subr.mxu0 0.0
  %475 = vmatpush1.msra.mxu0 0.0
  %476 = vmatprep.subr.mxu0 0.0
  %477 = vmatpush1.msra.mxu0 0.0
  %478 = vmatprep.subr.mxu0 0.0
  %479 = vmatpush1.msra.mxu0 0.0
  %480 = vmatprep.subr.mxu0 0.0
  %481 = vmatpush1.msra.mxu0 0.0
  %482 = vmatprep.subr.mxu0 0.0
  %483 = vmatpush1.msra.mxu0 0.0
  %484 = vmatprep.subr.mxu0 0.0
  %485 = vmatpush1.msra.mxu0 0.0
  %486 = vmatprep.subr.mxu0 0.0
  %487 = vmatpush1.msra.mxu0 0.0
  %488 = vmatprep.subr.mxu0 0.0
  %489 = vmatpush1.msra.mxu0 0.0
  %490 = vmatprep.subr.mxu0 0.0
  %491 = vmatpush1.msra.mxu0 0.0
  %492 = vmatprep.subr.mxu0 0.0
  %493 = vmatpush1.msra.mxu0 0.0
  %494 = vmatprep.mubr.f32.mxu0 0.0
  %495 = vmatmul.mubr.f32.gmra.mrb[0].mxu0 %v357
  %v496 = vpop.f32.mrb[0].mxu0
  %v497 = vadd.f32 %v353, %v496
  %v498 = vpop.f32.mrb[0].mxu0
  %v499 = vadd.f32 %v353, %v498
  %500 = vdwg.mxu0
  %v501 = vmax.f32 %v426, 0.0
  %v502 = vmax.f32 %v428, 0.0
  %v503 = vmax.f32 %v497, 0.0
  %v504 = vmax.f32 %v499, 0.0
  %v505 = vld [vmem:[%s4] sm:$0xff]
  %506 = vrot.lane.b32.xlu0 %v501, 17
  %v507 = vpop.permute.xlu0 %506
  %508 = vrot.lane.b32.xlu0 %v502, 17
  %v509 = vpop.permute.xlu0 %508
  %510 = vrot.lane.b32.xlu0 %v503, 17
  %v511 = vpop.permute.xlu0 %510
  %512 = vrot.lane.b32.xlu0 %v504, 17
  %v513 = vpop.permute.xlu0 %512
  %v514 = vsel %vm38, %v511, %v513
  %v515 = vsel %vm38, %v509, %v511
  %v516 = vsel %vm38, %v507, %v509
  %v517 = vsel %vm38, %v513, %v507
  %v518 = vmul.f32 %v517, %v48
  %v519 = vmul.f32 %v516, %v52
  %v520 = vmul.f32 %v515, %v56
  %v521 = vmul.f32 %v514, %v60
  %522 = vrot.lane.b32.xlu0 %v501, 16
  %v523 = vpop.permute.xlu0 %522
  %524 = vrot.lane.b32.xlu0 %v502, 16
  %v525 = vpop.permute.xlu0 %524
  %526 = vrot.lane.b32.xlu0 %v503, 16
  %v527 = vpop.permute.xlu0 %526
  %528 = vrot.lane.b32.xlu0 %v504, 16
  %v529 = vpop.permute.xlu0 %528
  %v530 = vsel %vm77, %v527, %v529
  %v531 = vsel %vm77, %v525, %v527
  %v532 = vsel %vm77, %v523, %v525
  %v533 = vsel %vm77, %v529, %v523
  %v534 = vmul.f32 %v533, %v88
  %v535 = vmul.f32 %v532, %v92
  %v536 = vmul.f32 %v531, %v96
  %v537 = vmul.f32 %v530, %v100
  %538 = vrot.lane.b32.xlu0 %v501, 15
  %v539 = vpop.permute.xlu0 %538
  %540 = vrot.lane.b32.xlu0 %v502, 15
  %v541 = vpop.permute.xlu0 %540
  %542 = vrot.lane.b32.xlu0 %v503, 15
  %v543 = vpop.permute.xlu0 %542
  %544 = vrot.lane.b32.xlu0 %v504, 15
  %v545 = vpop.permute.xlu0 %544
  %v546 = vsel %vm117, %v543, %v545
  %v547 = vsel %vm117, %v541, %v543
  %v548 = vsel %vm117, %v539, %v541
  %v549 = vsel %vm117, %v545, %v539
  %v550 = vmul.f32 %v549, %v128
  %v551 = vmul.f32 %v548, %v132
  %v552 = vmul.f32 %v547, %v136
  %v553 = vmul.f32 %v546, %v140
  %554 = vrot.lane.b32.xlu0 %v501, 1
  %v555 = vpop.permute.xlu0 %554
  %556 = vrot.lane.b32.xlu0 %v502, 1
  %v557 = vpop.permute.xlu0 %556
  %558 = vrot.lane.b32.xlu0 %v503, 1
  %v559 = vpop.permute.xlu0 %558
  %560 = vrot.lane.b32.xlu0 %v504, 1
  %v561 = vpop.permute.xlu0 %560
  %v562 = vsel %vm157, %v559, %v561
  %v563 = vsel %vm157, %v557, %v559
  %v564 = vsel %vm157, %v555, %v557
  %v565 = vsel %vm157, %v561, %v555
  %v566 = vmul.f32 %v565, %v168
  %v567 = vmul.f32 %v564, %v172
  %v568 = vmul.f32 %v563, %v176
  %v569 = vmul.f32 %v562, %v180
  %570 = vrot.lane.b32.xlu0 %v501, 127
  %v571 = vpop.permute.xlu0 %570
  %572 = vrot.lane.b32.xlu0 %v502, 127
  %v573 = vpop.permute.xlu0 %572
  %574 = vrot.lane.b32.xlu0 %v503, 127
  %v575 = vpop.permute.xlu0 %574
  %576 = vrot.lane.b32.xlu0 %v504, 127
  %v577 = vpop.permute.xlu0 %576
  %v578 = vsel %vm197, %v575, %v577
  %v579 = vsel %vm197, %v573, %v575
  %v580 = vsel %vm197, %v571, %v573
  %v581 = vsel %vm197, %v577, %v571
  %v582 = vmul.f32 %v580, %v208
  %v583 = vmul.f32 %v579, %v212
  %v584 = vmul.f32 %v578, %v216
  %v585 = vmul.f32 %v581, %v220
  %586 = vrot.lane.b32.xlu0 %v501, 113
  %v587 = vpop.permute.xlu0 %586
  %588 = vrot.lane.b32.xlu0 %v502, 113
  %v589 = vpop.permute.xlu0 %588
  %590 = vrot.lane.b32.xlu0 %v503, 113
  %v591 = vpop.permute.xlu0 %590
  %592 = vrot.lane.b32.xlu0 %v504, 113
  %v593 = vpop.permute.xlu0 %592
  %v594 = vsel %vm237, %v591, %v593
  %v595 = vsel %vm237, %v589, %v591
  %v596 = vsel %vm237, %v587, %v589
  %v597 = vsel %vm237, %v593, %v587
  %v598 = vmul.f32 %v596, %v248
  %v599 = vmul.f32 %v595, %v252
  %v600 = vmul.f32 %v594, %v256
  %v601 = vmul.f32 %v597, %v260
  %602 = vrot.lane.b32.xlu0 %v501, 112
  %v603 = vpop.permute.xlu0 %602
  %604 = vrot.lane.b32.xlu0 %v502, 112
  %v605 = vpop.permute.xlu0 %604
  %606 = vrot.lane.b32.xlu0 %v503, 112
  %v607 = vpop.permute.xlu0 %606
  %608 = vrot.lane.b32.xlu0 %v504, 112
  %v609 = vpop.permute.xlu0 %608
  %v610 = vsel %vm277, %v607, %v609
  %v611 = vsel %vm277, %v605, %v607
  %v612 = vsel %vm277, %v603, %v605
  %v613 = vsel %vm277, %v609, %v603
  %v614 = vmul.f32 %v612, %v288
  %v615 = vmul.f32 %v611, %v292
  %v616 = vmul.f32 %v610, %v296
  %v617 = vmul.f32 %v613, %v300
  %618 = vrot.lane.b32.xlu0 %v501, 111
  %v619 = vpop.permute.xlu0 %618
  %620 = vrot.lane.b32.xlu0 %v502, 111
  %v621 = vpop.permute.xlu0 %620
  %622 = vrot.lane.b32.xlu0 %v503, 111
  %v623 = vpop.permute.xlu0 %622
  %624 = vrot.lane.b32.xlu0 %v504, 111
  %v625 = vpop.permute.xlu0 %624
  %v626 = vsel %vm317, %v623, %v625
  %v627 = vsel %vm317, %v621, %v623
  %v628 = vsel %vm317, %v619, %v621
  %v629 = vsel %vm317, %v625, %v619
  %v630 = vmul.f32 %v628, %v328
  %v631 = vmul.f32 %v627, %v332
  %v632 = vmul.f32 %v626, %v336
  %v633 = vmul.f32 %v629, %v340
  %v634 = vld [vmem:[%s5] sm:$0xff]
  %636 = vset.pattern.permute.xlu0 0
  %637 = vperm.xlu0 %636, %v634
  %v638 = vpop.permute.xlu0 %637
  %v641 = vsel %vm355, %v505, 0
  %643 = vmatprep.subr.mxu0 %v519
  %644 = vmatpush1.msra.mxu0 %v518
  %645 = vmatprep.subr.mxu0 %v535
  %646 = vmatpush1.msra.mxu0 %v534
  %647 = vmatprep.subr.mxu0 %v551
  %648 = vmatpush1.msra.mxu0 %v550
  %649 = vmatprep.subr.mxu0 %v567
  %650 = vmatpush1.msra.mxu0 %v566
  %651 = vmatprep.subr.mxu0 %v502
  %652 = vmatpush1.msra.mxu0 %v501
  %653 = vmatprep.subr.mxu0 %v583
  %654 = vmatpush1.msra.mxu0 %v582
  %655 = vmatprep.subr.mxu0 %v599
  %656 = vmatpush1.msra.mxu0 %v598
  %657 = vmatprep.subr.mxu0 %v615
  %658 = vmatpush1.msra.mxu0 %v614
  %659 = vmatprep.subr.mxu0 %v631
  %660 = vmatpush1.msra.mxu0 %v630
  %661 = vmatprep.subr.mxu0 0.0
  %662 = vmatpush1.msra.mxu0 0.0
  %663 = vmatprep.subr.mxu0 0.0
  %664 = vmatpush1.msra.mxu0 0.0
  %665 = vmatprep.subr.mxu0 0.0
  %666 = vmatpush1.msra.mxu0 0.0
  %667 = vmatprep.subr.mxu0 0.0
  %668 = vmatpush1.msra.mxu0 0.0
  %669 = vmatprep.subr.mxu0 0.0
  %670 = vmatpush1.msra.mxu0 0.0
  %671 = vmatprep.subr.mxu0 0.0
  %672 = vmatpush1.msra.mxu0 0.0
  %673 = vmatprep.subr.mxu0 0.0
  %674 = vmatpush1.msra.mxu0 0.0
  %675 = vmatprep.subr.mxu0 0.0
  %676 = vmatpush1.msra.mxu0 0.0
  %677 = vmatprep.subr.mxu0 0.0
  %678 = vmatpush1.msra.mxu0 0.0
  %679 = vmatprep.subr.mxu0 0.0
  %680 = vmatpush1.msra.mxu0 0.0
  %681 = vmatprep.subr.mxu0 0.0
  %682 = vmatpush1.msra.mxu0 0.0
  %683 = vmatprep.subr.mxu0 0.0
  %684 = vmatpush1.msra.mxu0 0.0
  %685 = vmatprep.subr.mxu0 0.0
  %686 = vmatpush1.msra.mxu0 0.0
  %687 = vmatprep.subr.mxu0 0.0
  %688 = vmatpush1.msra.mxu0 0.0
  %689 = vmatprep.subr.mxu0 0.0
  %690 = vmatpush1.msra.mxu0 0.0
  %691 = vmatprep.subr.mxu0 0.0
  %692 = vmatpush1.msra.mxu0 0.0
  %693 = vmatprep.subr.mxu0 0.0
  %694 = vmatpush1.msra.mxu0 0.0
  %695 = vmatprep.subr.mxu0 0.0
  %696 = vmatpush1.msra.mxu0 0.0
  %697 = vmatprep.subr.mxu0 0.0
  %698 = vmatpush1.msra.mxu0 0.0
  %699 = vmatprep.subr.mxu0 0.0
  %700 = vmatpush1.msra.mxu0 0.0
  %701 = vmatprep.subr.mxu0 0.0
  %702 = vmatpush1.msra.mxu0 0.0
  %703 = vmatprep.subr.mxu0 0.0
  %704 = vmatpush1.msra.mxu0 0.0
  %705 = vmatprep.subr.mxu0 0.0
  %706 = vmatpush1.msra.mxu0 0.0
  %707 = vmatprep.mubr.f32.mxu0 0.0
  %708 = vmatmul.mubr.f32.gmra.mrb[0].mxu0 %v641
  %v709 = vpop.f32.mrb[0].mxu0
  %v710 = vadd.f32 %v638, %v709
  %v711 = vpop.f32.mrb[0].mxu0
  %v712 = vadd.f32 %v638, %v711
  %713 = vdwg.mxu0
  %714 = vmatprep.subr.mxu0 %v521
  %715 = vmatpush1.msra.mxu0 %v520
  %716 = vmatprep.subr.mxu0 %v537
  %717 = vmatpush1.msra.mxu0 %v536
  %718 = vmatprep.subr.mxu0 %v553
  %719 = vmatpush1.msra.mxu0 %v552
  %720 = vmatprep.subr.mxu0 %v569
  %721 = vmatpush1.msra.mxu0 %v568
  %722 = vmatprep.subr.mxu0 %v504
  %723 = vmatpush1.msra.mxu0 %v503
  %724 = vmatprep.subr.mxu0 %v585
  %725 = vmatpush1.msra.mxu0 %v584
  %726 = vmatprep.subr.mxu0 %v601
  %727 = vmatpush1.msra.mxu0 %v600
  %728 = vmatprep.subr.mxu0 %v617
  %729 = vmatpush1.msra.mxu0 %v616
  %730 = vmatprep.subr.mxu0 %v633
  %731 = vmatpush1.msra.mxu0 %v632
  %732 = vmatprep.subr.mxu0 0.0
  %733 = vmatpush1.msra.mxu0 0.0
  %734 = vmatprep.subr.mxu0 0.0
  %735 = vmatpush1.msra.mxu0 0.0
  %736 = vmatprep.subr.mxu0 0.0
  %737 = vmatpush1.msra.mxu0 0.0
  %738 = vmatprep.subr.mxu0 0.0
  %739 = vmatpush1.msra.mxu0 0.0
  %740 = vmatprep.subr.mxu0 0.0
  %741 = vmatpush1.msra.mxu0 0.0
  %742 = vmatprep.subr.mxu0 0.0
  %743 = vmatpush1.msra.mxu0 0.0
  %744 = vmatprep.subr.mxu0 0.0
  %745 = vmatpush1.msra.mxu0 0.0
  %746 = vmatprep.subr.mxu0 0.0
  %747 = vmatpush1.msra.mxu0 0.0
  %748 = vmatprep.subr.mxu0 0.0
  %749 = vmatpush1.msra.mxu0 0.0
  %750 = vmatprep.subr.mxu0 0.0
  %751 = vmatpush1.msra.mxu0 0.0
  %752 = vmatprep.subr.mxu0 0.0
  %753 = vmatpush1.msra.mxu0 0.0
  %754 = vmatprep.subr.mxu0 0.0
  %755 = vmatpush1.msra.mxu0 0.0
  %756 = vmatprep.subr.mxu0 0.0
  %757 = vmatpush1.msra.mxu0 0.0
  %758 = vmatprep.subr.mxu0 0.0
  %759 = vmatpush1.msra.mxu0 0.0
  %760 = vmatprep.subr.mxu0 0.0
  %761 = vmatpush1.msra.mxu0 0.0
  %762 = vmatprep.subr.mxu0 0.0
  %763 = vmatpush1.msra.mxu0 0.0
  %764 = vmatprep.subr.mxu0 0.0
  %765 = vmatpush1.msra.mxu0 0.0
  %766 = vmatprep.subr.mxu0 0.0
  %767 = vmatpush1.msra.mxu0 0.0
  %768 = vmatprep.subr.mxu0 0.0
  %769 = vmatpush1.msra.mxu0 0.0
  %770 = vmatprep.subr.mxu0 0.0
  %771 = vmatpush1.msra.mxu0 0.0
  %772 = vmatprep.subr.mxu0 0.0
  %773 = vmatpush1.msra.mxu0 0.0
  %774 = vmatprep.subr.mxu0 0.0
  %775 = vmatpush1.msra.mxu0 0.0
  %776 = vmatprep.subr.mxu0 0.0
  %777 = vmatpush1.msra.mxu0 0.0
  %778 = vmatprep.mubr.f32.mxu0 0.0
  %779 = vmatmul.mubr.f32.gmra.mrb[0].mxu0 %v641
  %v780 = vpop.f32.mrb[0].mxu0
  %v781 = vadd.f32 %v638, %v780
  %v782 = vpop.f32.mrb[0].mxu0
  %v783 = vadd.f32 %v638, %v782
  %784 = vdwg.mxu0
  %v785 = vmax.f32 %v710, 0.0
  %v786 = vmax.f32 %v712, 0.0
  %v787 = vmax.f32 %v781, 0.0
  %v788 = vmax.f32 %v783, 0.0
  %789 = vst [vmem:[%s6] sm:$0xff] %v785
  %790 = vst [vmem:[%s6 + $0x8] sm:$0xff] %v786
  %791 = vst [vmem:[%s6 + $0x10] sm:$0xff] %v787
  %792 = vst [vmem:[%s6 + $0x18] sm:$0xff] %v788
  // Predicated region
  $region26: #{_double_conv_impl.1} parent=0 // pred_check
    _
  $region27: #{_double_conv_impl.1} parent=0 // pred_check_branch
    %794 = sbr.rel (0) target = $region29
  $region28: #{_double_conv_impl.1} parent=0 // pred_region
    _
  $region29: #{_double_conv_impl.1} parent=0 // pred_fallthru
    _
  // Predicated region
  $region30: #{_double_conv_impl.1} parent=0 // pred_check
    _
  $region31: #{_double_conv_impl.1} parent=0 // pred_check_branch
    %796 = sbr.rel (0) target = $region33
  $region32: #{_double_conv_impl.1} parent=0 // pred_region
    _
  $region33: #{_double_conv_impl.1} parent=0 // pred_fallthru
    _

</llo_original>
